<compile_context>
chip_gen: v7x
topology: tpu7x:2x2x1
jax: 0.10.0
libtpu: 0.0.40
codegen_flags: <defaults>
</compile_context>

<pallas_src>
import jax
import jax.numpy as jnp
from jax.experimental import pallas as pl
from jax.experimental.pallas import tpu as pltpu


def _pose2vec_kernel(x_ref, o_ref):
    d = x_ref.shape[-1]
    # Pose features -> lanes [0, D) of the output tile.
    o_ref[:, :d] = x_ref[...]
    # Activation column: constant 1.0 in lane D.
    o_ref[:, d:] = jnp.ones((o_ref.shape[0], 1), dtype=o_ref.dtype)


def _choose_row_block(batch, d, itemsize):
    """Row-block size: ~4 MiB of combined input+output tile, dtype-aware sublane."""
    row_bytes = (d + (d + 1)) * itemsize          # one input row + one output row
    target_bytes = 4 * 1024 * 1024                # well past the overhead-amortization knee
    max_rows = max(1, target_bytes // max(row_bytes, 1))
    if batch <= max_rows:
        return batch                              # single block over all rows (full-dim exception)
    sub = max(8, 32 // itemsize)                  # f32: 8, bf16: 16, int8/fp8: 32
    tm = (max_rows // sub) * sub
    return max(tm, sub)


def pose2vector_rep(x: jax.Array) -> jax.Array:
    """JAX/Pallas equivalent of Pose2VectorRepLayer.forward."""
    assert x.ndim == 2, f"expected (batch, pose_dim) input, got shape {x.shape}"
    batch, d = x.shape
    dtype = x.dtype
    itemsize = jnp.dtype(dtype).itemsize

    tm = _choose_row_block(batch, d, itemsize)
    grid = (pl.cdiv(batch, tm),)                  # single (row-block) grid axis

    out2d = pl.pallas_call(
        _pose2vec_kernel,
        out_shape=jax.ShapeDtypeStruct((batch, d + 1), dtype),
        grid_spec=pltpu.PrefetchScalarGridSpec(
            num_scalar_prefetch=0,
            grid=grid,
            in_specs=[pl.BlockSpec((tm, d), lambda i: (i, 0))],
            out_specs=pl.BlockSpec((tm, d + 1), lambda i: (i, 0)),
        ),
        compiler_params=pltpu.CompilerParams(
            dimension_semantics=("parallel",),
            vmem_limit_bytes=32 * 1024 * 1024,
        ),
    )(x)

    # Free metadata reshape to the PyTorch view (B, 1, 1, 1, D+1).
    return out2d.reshape(batch, 1, 1, 1, d + 1)


class Pose2VectorRepLayer:
    """JAX/Pallas equivalent of the PyTorch Pose2VectorRepLayer module."""

    def __call__(self, x):
        return pose2vector_rep(x)


if __name__ == "__main__":
    key = jax.random.PRNGKey(0)
    # Small shape consistent with the module: batch=2, flattened 4x4 pose = 16.
    B, D = 2, 16
    x = jax.random.normal(key, (B, D), dtype=jnp.float32)

    layer = Pose2VectorRepLayer()
    y = jax.block_until_ready(layer(x))

    # Pure-JAX reference of the PyTorch forward.
    ref = jnp.concatenate([x, jnp.ones((B, 1), x.dtype)], axis=1)
    ref = ref.reshape(B, 1, 1, 1, D + 1)

    assert y.shape == (B, 1, 1, 1, D + 1), y.shape
    assert y.dtype == x.dtype
    assert bool(jnp.all(y == ref))

    print("KERNEL_OK")
</pallas_src>

<mosaic_0001>
module attributes {stable_mosaic.version = 11 : i64} {
  func.func @_pose2vec_kernel(%arg0: i32, %arg1: memref<2x16xf32, #tpu.memory_space<vmem>>, %arg2: memref<2x17xf32, #tpu.memory_space<vmem>>) attributes {dimension_semantics = [#tpu.dimension_semantics<parallel>], iteration_bounds = array<i64: 1>, scalar_prefetch = 0 : i64, scratch_operands = 0 : i64, tpu.core_type = #tpu.core_type<tc>, window_params = [{transform_indices = @transform_0, window_bounds = array<i64: 2, 16>}, {transform_indices = @transform_1, window_bounds = array<i64: 2, 17>}]} {
    %c0 = arith.constant 0 : index
    %c0_0 = arith.constant 0 : index
    %0 = vector.load %arg1[%c0, %c0_0] : memref<2x16xf32, #tpu.memory_space<vmem>>, vector<2x16xf32>
    %c0_1 = arith.constant 0 : index
    %c0_2 = arith.constant 0 : index
    %1 = vector.load %arg2[%c0_1, %c0_2] : memref<2x17xf32, #tpu.memory_space<vmem>>, vector<2x16xf32>
    tpu.vector_store %arg2[%c0_1, %c0_2], %0 {strides = array<i32>} : memref<2x17xf32, #tpu.memory_space<vmem>>, vector<2x16xf32>,
    %cst = arith.constant 1.000000e+00 : f32
    %2 = vector.broadcast %cst : f32 to vector<2x1xf32>
    %c0_3 = arith.constant 0 : index
    %c16 = arith.constant 16 : index
    %3 = vector.load %arg2[%c0_3, %c16] : memref<2x17xf32, #tpu.memory_space<vmem>>, vector<2x1xf32>
    tpu.vector_store %arg2[%c0_3, %c16], %2 {strides = array<i32>} : memref<2x17xf32, #tpu.memory_space<vmem>>, vector<2x1xf32>,
    return
  }
  func.func @transform_0(%arg0: i32) -> (i32, i32) {
    %c0_i32 = arith.constant 0 : i32
    %c0_i32_0 = arith.constant 0 : i32
    return %arg0, %c0_i32 : i32, i32
  }
  func.func @transform_1(%arg0: i32) -> (i32, i32) {
    %c0_i32 = arith.constant 0 : i32
    %c0_i32_0 = arith.constant 0 : i32
    return %arg0, %c0_i32 : i32, i32
  }
}

</mosaic_0001>

<llo_original>
// kernel: tpu_custom_call.1
$region0: #{tpu_custom_call.1}
  #allocation0 [shape = 'u32[]', space=smem, size = 0x4, offset = 0x4, fixed_abs, tag = 'smem constant byte address 0x4 - core index']
  #allocation1 [shape = 'u32[144,128]{1,0:T(1,128)}', space=vmem, size = 0x12000, scoped, tag = 'internal scratch']
  %s0 = inlined_call_operand.hbm [shape: f32[2,16], index: 0, kind: input, shape index: {}]
  %s1 = inlined_call_operand.hbm [shape: f32[2,17], index: 1, kind: output, shape index: {}]
  %s2 = sld [smem:[#allocation0]]
  $region18: #{tpu_custom_call.1} parent=0
    _
  %s4 = ssub.s32 1, %s2
  %s5 = scalar_select 0, %s4, %s2
  $region1: #{tpu_custom_call.1} parent=0
    #allocation2 [shape = 'u8[1024]{0}', space=vmem, size = 0x400, scoped, tag = 'input window, operand 0, single buffered']
    #allocation3 [shape = 's32[1]{0}', space=sflag, size = 0x4, scoped, tag = 'scoped memory for tpu_custom_call.1']
    #allocation4 [shape = 's32[1]{0}', space=sflag, size = 0x4, scoped, tag = 'scoped memory for tpu_custom_call.1']
    #allocation5 [shape = 'u8[1024]{0}', space=vmem, size = 0x400, scoped, tag = 'output window, operand 0, single buffered']
    %6 = vsyncpa [#allocation3], 0
    %7 = vsyncpa [#allocation4], 0
    // Predicated region
    $region2: #{tpu_custom_call.1} parent=1 // pred_check
      _
    $region3: #{tpu_custom_call.1} parent=1 // pred_check_branch
      %9 = sbr.rel (0) target = $region5
    $region4: #{tpu_custom_call.1} parent=1 // pred_region
      %s11 = ssub.s32 32, 32
      %12 = vsyncadd [#allocation3], %s11
      %s14 = sshll.u32 [#allocation2], 4
      %s15 = int_to_ptr.vmem [resolvable:$true] %s14
      %17 = dma.hbm_to_vmem [thread:$0]  %s0, 32, %s15, [#allocation3]
    $region5: #{tpu_custom_call.1} parent=1 // pred_fallthru
      _
    // Predicated region
    $region6: #{tpu_custom_call.1} parent=1 // pred_check
      _
    $region7: #{tpu_custom_call.1} parent=1 // pred_check_branch
      %19 = sbr.rel (0) target = $region9
    $region8: #{tpu_custom_call.1} parent=1 // pred_region
      %20 = dma.done [#allocation3], 32
    $region9: #{tpu_custom_call.1} parent=1 // pred_fallthru
      _
    %v21 = vld [vmem:[#allocation2] sm:$0x3]
    %vm22 = vcmask 123904
    %23 = vst.msk [vmem:[#allocation5] sm:$0x3] %vm22, %v21
    %vm24 = vcmask 132224
    %25 = vst.msk [vmem:[#allocation5] sm:$0x3] %vm24, 1.0
    // Predicated region
    $region10: #{tpu_custom_call.1} parent=1 // pred_check
      _
    $region11: #{tpu_custom_call.1} parent=1 // pred_check_branch
      %27 = sbr.rel (0) target = $region13
    $region12: #{tpu_custom_call.1} parent=1 // pred_region
      %s29 = ssub.s32 32, 32
      %30 = vsyncadd [#allocation4], %s29
      %s32 = sshll.u32 [#allocation5], 4
      %s33 = int_to_ptr.vmem [resolvable:$true] %s32
      %35 = dma.vmem_to_hbm [thread:$0]  %s33, 32, %s1, [#allocation4]
    $region13: #{tpu_custom_call.1} parent=1 // pred_fallthru
      _
    // Predicated region
    $region14: #{tpu_custom_call.1} parent=1 // pred_check
      _
    $region15: #{tpu_custom_call.1} parent=1 // pred_check_branch
      %37 = sbr.rel (0) target = $region17
    $region16: #{tpu_custom_call.1} parent=1 // pred_region
      %38 = dma.done [#allocation4], 32
    $region17: #{tpu_custom_call.1} parent=1 // pred_fallthru
      _
    %39 = vsyncpa [#allocation3], 1
    %40 = vsyncpa [#allocation4], 1

</llo_original>
